<compile_context>
chip_gen: v7x
topology: tpu7x:2x2x1
jax: 0.10.0
libtpu: 0.0.40
codegen_flags: <defaults>
</compile_context>

<pallas_src>
import functools

import jax
import jax.numpy as jnp
from jax.experimental import pallas as pl
from jax.experimental.pallas import tpu as pltpu

EPS = 1e-5   # nn.LayerNorm default eps
LANE = 128


def _round_up(n, m):
    return ((n + m - 1) // m) * m


def _choose_tb(B):
    """Batch tile: multiple of 8, <=256 rows.

    Prefers a tile that divides the 8-padded batch (no row padding) and keeps
    >=2 grid steps once there is enough work for v7x's two TensorCores
    (>=64 rows per core). Tiny batches get a single tile covering B.
    """
    bp = _round_up(B, 8)
    if bp <= 128:
        return bp                                  # one tile covers the batch
    half = bp // 2
    hi = min(256, half - half % 8)
    for cand in range(hi, 63, -8):                 # prefer divisors, >=64 rows
        if bp % cand == 0:
            return cand
    return hi                                      # no nice divisor: pad last tile


def resblock_kernel(x_ref,
                    wf_ref, bf_ref,      # fused [shortcut_pad | layer0_pad] weight/bias
                    w2_ref, b2_ref,      # layer1 (d0p -> d1p)
                    w3_ref, b3_ref,      # layer2 (d1p -> d1p)
                    gamma_ref, beta_ref,
                    out_ref,
                    *, d1):
    d1p = w3_ref.shape[0]           # padded output feature width (static, =128 here)
    cdt = wf_ref.dtype              # matmul operand dtype (bf16 or f32)

    x = x_ref[...].astype(cdt)                             # (TB, d0)

    # Fused MXU call: z = x @ [ws_pad | w1_pad] + [bs_pad | b1_pad]
    # z is (TB, d1p + d0p) -- exactly two 128-lane groups, so both slices below
    # are vreg-aligned and lane-dense.
    z = jnp.dot(x, wf_ref[...], preferred_element_type=jnp.float32) + bf_ref[...]
    sc = z[:, :d1p]                                        # shortcut path
    h = jnp.maximum(z[:, d1p:], 0.0)                       # ReLU(layer0); padded cols stay 0

    # layer1: Linear(d0 -> d1) + ReLU  (K padded to d0p, N padded to d1p; exact)
    h = jnp.dot(h.astype(cdt), w2_ref[...],
                preferred_element_type=jnp.float32) + b2_ref[...]
    h = jnp.maximum(h, 0.0)

    # layer2: Linear(d1 -> d1), no activation
    h = jnp.dot(h.astype(cdt), w3_ref[...],
                preferred_element_type=jnp.float32) + b3_ref[...]

    y = h + sc                                             # (TB, d1p); padded cols == 0

    # total_normal: LayerNorm over the true d1 features. One-pass sums over the
    # padded width are exact because padded columns of y are identically zero.
    inv_d1 = 1.0 / d1
    s1 = jnp.sum(y, axis=-1, keepdims=True)
    s2 = jnp.sum(y * y, axis=-1, keepdims=True)
    mean = s1 * inv_d1
    var = jnp.maximum(s2 * inv_d1 - mean * mean, 0.0)      # clamp: cancellation safety
    inv = jax.lax.rsqrt(var + EPS)
    # gamma/beta are ZERO-padded, so padded output columns are exactly 0.
    out_ref[...] = ((y - mean) * inv * gamma_ref[...] + beta_ref[...]).astype(out_ref.dtype)


def prepare_params(p, *, use_bf16=True):
    """One-time parameter prep: transpose to (in, out), fuse shortcut+layer0
    (both halves padded to 128-lane multiples), zero-pad feature dims to 128
    multiples, cast matmul weights to bf16 (biases / LN affine stay f32)."""
    d0 = p["w1"].shape[0]
    d1 = p["w3"].shape[0]
    d0p = _round_up(d0, LANE)
    d1p = _round_up(d1, LANE)
    wdt = jnp.bfloat16 if use_bf16 else jnp.float32

    def pad_cols(w, n):   # pad (in, out) weight's out-columns with zeros to n
        return jnp.pad(w, ((0, 0), (0, n - w.shape[1])))

    def pad_vec(v, n):
        return jnp.pad(v, (0, n - v.shape[0]))

    w1 = p["w1"].T   # (d0, d0)
    w2 = p["w2"].T   # (d0, d1)
    w3 = p["w3"].T   # (d1, d1)
    ws = p["ws"].T   # (d0, d1)

    # Fused weight: [shortcut (padded to d1p) | layer0 (padded to d0p)] -> (d0, d1p+d0p)
    wf = jnp.concatenate([pad_cols(ws, d1p), pad_cols(w1, d0p)], axis=1).astype(wdt)
    bf = jnp.concatenate([pad_vec(p["bs"], d1p),
                          pad_vec(p["b1"], d0p)])[None, :].astype(jnp.float32)

    return {
        "d0": d0, "d1": d1, "d0p": d0p, "d1p": d1p,
        "wf": wf, "bf": bf,
        # layer1: K padded d0->d0p (zero rows), N padded d1->d1p (zero cols)
        "w2": jnp.pad(w2, ((0, d0p - d0), (0, d1p - d1))).astype(wdt),
        "b2": pad_vec(p["b2"], d1p)[None, :].astype(jnp.float32),
        "w3": jnp.pad(w3, ((0, d1p - d1), (0, d1p - d1))).astype(wdt),
        "b3": pad_vec(p["b3"], d1p)[None, :].astype(jnp.float32),
        # NOTE: gamma/beta MUST be zero-padded (keeps padded output columns at 0).
        "gamma": pad_vec(p["gamma"], d1p)[None, :].astype(jnp.float32),
        "beta": pad_vec(p["beta"], d1p)[None, :].astype(jnp.float32),
    }


def resblock_forward(x, prep, *, tb=None, out_dtype=jnp.bfloat16):
    """x: (B, d0) float32. prep: output of prepare_params.

    Returns (B, d1p) with the true result in the first d1 columns and exact
    zeros in the padded columns (kept padded to avoid an extra strided-copy
    pass over the kernel output)."""
    B, d0 = x.shape
    d1, d1p = prep["d1"], prep["d1p"]

    if tb is None:
        tb = _choose_tb(B)
    tb = max(8, _round_up(tb, 8))

    bp = _round_up(B, tb)
    xp = x if bp == B else jnp.pad(x, ((0, bp - B), (0, 0)))
    grid = (bp // tb,)

    def build(single_buffer_weights):
        def resident(a):
            # Constant index_map -> stays VMEM-resident across the whole grid.
            if single_buffer_weights:
                return pl.BlockSpec(a.shape, lambda i: (0, 0),
                                    pipeline_mode=pl.Buffered(1))
            return pl.BlockSpec(a.shape, lambda i: (0, 0))

        return pl.pallas_call(
            functools.partial(resblock_kernel, d1=d1),
            out_shape=jax.ShapeDtypeStruct((bp, d1p), out_dtype),
            grid=grid,
            in_specs=[
                pl.BlockSpec((tb, d0), lambda i: (i, 0)),   # x: batch-tiled
                resident(prep["wf"]), resident(prep["bf"]),
                resident(prep["w2"]), resident(prep["b2"]),
                resident(prep["w3"]), resident(prep["b3"]),
                resident(prep["gamma"]), resident(prep["beta"]),
            ],
            out_specs=pl.BlockSpec((tb, d1p), lambda i: (i, 0)),
            compiler_params=pltpu.CompilerParams(
                dimension_semantics=("parallel",),          # megacore-shard batch axis
                vmem_limit_bytes=32 * 1024 * 1024,          # v7x-safe scoped budget
            ),
        )

    args = (xp, prep["wf"], prep["bf"], prep["w2"], prep["b2"],
            prep["w3"], prep["b3"], prep["gamma"], prep["beta"])
    try:
        out = build(True)(*args)
    except Exception:
        # Fallback if this JAX build rejects pipeline_mode on top-level
        # pallas_call BlockSpecs (default double-buffering of the tiny
        # resident weights is harmless).
        out = build(False)(*args)

    return out if bp == B else out[:B]


def make_params(key, d0, d1):
    """Deterministic synthetic parameters. PyTorch Linear weight shape is (out, in)."""
    ks = jax.random.split(key, 8)
    scale = 0.1
    return {
        "w1": scale * jax.random.normal(ks[0], (d0, d0), jnp.float32),
        "b1": scale * jax.random.normal(ks[1], (d0,), jnp.float32),
        "w2": scale * jax.random.normal(ks[2], (d1, d0), jnp.float32),
        "b2": scale * jax.random.normal(ks[3], (d1,), jnp.float32),
        "w3": scale * jax.random.normal(ks[4], (d1, d1), jnp.float32),
        "b3": scale * jax.random.normal(ks[5], (d1,), jnp.float32),
        "ws": scale * jax.random.normal(ks[6], (d1, d0), jnp.float32),
        "bs": scale * jax.random.normal(ks[7], (d1,), jnp.float32),
        # nn.LayerNorm default init
        "gamma": jnp.ones((d1,), jnp.float32),
        "beta": jnp.zeros((d1,), jnp.float32),
    }


def resblock_ref(x, p):
    """Pure-JAX f32 reference mirroring the PyTorch forward."""
    h = jnp.maximum(x @ p["w1"].T + p["b1"], 0.0)
    h = jnp.maximum(h @ p["w2"].T + p["b2"], 0.0)
    h = h @ p["w3"].T + p["b3"]
    sc = x @ p["ws"].T + p["bs"]
    y = h + sc
    mean = y.mean(-1, keepdims=True)
    var = ((y - mean) ** 2).mean(-1, keepdims=True)
    return (y - mean) / jnp.sqrt(var + EPS) * p["gamma"] + p["beta"]


if __name__ == "__main__":
    key = jax.random.PRNGKey(0)
    kx, kp = jax.random.split(key)

    B, d0, d1 = 16, 32, 64   # dims = [32, 64]
    x = jax.random.normal(kx, (B, d0), jnp.float32)
    params = make_params(kp, d0, d1)
    prep = prepare_params(params, use_bf16=True)

    out_padded = jax.block_until_ready(resblock_forward(x, prep))
    assert out_padded.shape == (B, prep["d1p"])

    # Verification only: consumers can keep the zero-padded (B, 128) layout;
    # the column slice here is NOT part of the kernel path.
    out = out_padded[:, :d1].astype(jnp.float32)
    ref = resblock_ref(x, params)

    # Padded columns must be exactly zero (gamma/beta zero-padded).
    assert float(jnp.max(jnp.abs(out_padded[:, d1:].astype(jnp.float32)))) < 1e-6

    max_err = float(jnp.max(jnp.abs(out - ref)))
    # bf16 matmul operands + bf16 output (f32 accumulation) vs f32 reference.
    assert jnp.allclose(out, ref, atol=5e-2, rtol=5e-2), \
        f"mismatch vs reference (max abs err {max_err})"

    print("KERNEL_OK")
</pallas_src>

<mosaic_0001>
module attributes {stable_mosaic.version = 11 : i64} {
  func.func @resblock_kernel(%arg0: i32, %arg1: memref<16x32xf32, #tpu.memory_space<vmem>>, %arg2: memref<32x256xbf16, #tpu.memory_space<vmem>>, %arg3: memref<1x256xf32, #tpu.memory_space<vmem>>, %arg4: memref<128x128xbf16, #tpu.memory_space<vmem>>, %arg5: memref<1x128xf32, #tpu.memory_space<vmem>>, %arg6: memref<128x128xbf16, #tpu.memory_space<vmem>>, %arg7: memref<1x128xf32, #tpu.memory_space<vmem>>, %arg8: memref<1x128xf32, #tpu.memory_space<vmem>>, %arg9: memref<1x128xf32, #tpu.memory_space<vmem>>, %arg10: memref<16x128xbf16, #tpu.memory_space<vmem>>) attributes {dimension_semantics = [#tpu.dimension_semantics<parallel>], iteration_bounds = array<i64: 1>, scalar_prefetch = 0 : i64, scratch_operands = 0 : i64, tpu.core_type = #tpu.core_type<tc>, window_params = [{transform_indices = @transform_0, window_bounds = array<i64: 16, 32>}, {pipeline_mode = #tpu.pipeline_mode<synchronous>, transform_indices = @transform_1, window_bounds = array<i64: 32, 256>}, {pipeline_mode = #tpu.pipeline_mode<synchronous>, transform_indices = @transform_2, window_bounds = array<i64: 1, 256>}, {pipeline_mode = #tpu.pipeline_mode<synchronous>, transform_indices = @transform_3, window_bounds = array<i64: 128, 128>}, {pipeline_mode = #tpu.pipeline_mode<synchronous>, transform_indices = @transform_4, window_bounds = array<i64: 1, 128>}, {pipeline_mode = #tpu.pipeline_mode<synchronous>, transform_indices = @transform_5, window_bounds = array<i64: 128, 128>}, {pipeline_mode = #tpu.pipeline_mode<synchronous>, transform_indices = @transform_6, window_bounds = array<i64: 1, 128>}, {pipeline_mode = #tpu.pipeline_mode<synchronous>, transform_indices = @transform_7, window_bounds = array<i64: 1, 128>}, {pipeline_mode = #tpu.pipeline_mode<synchronous>, transform_indices = @transform_8, window_bounds = array<i64: 1, 128>}, {transform_indices = @transform_9, window_bounds = array<i64: 16, 128>}]} {
    %c0 = arith.constant 0 : index
    %c0_0 = arith.constant 0 : index
    %0 = vector.load %arg1[%c0, %c0_0] : memref<16x32xf32, #tpu.memory_space<vmem>>, vector<16x32xf32>
    %1 = arith.truncf %0 : vector<16x32xf32> to vector<16x32xbf16>
    %c0_1 = arith.constant 0 : index
    %c0_2 = arith.constant 0 : index
    %2 = vector.load %arg2[%c0_1, %c0_2] : memref<32x256xbf16, #tpu.memory_space<vmem>>, vector<32x256xbf16>
    %cst = arith.constant dense<0.000000e+00> : vector<16x256xf32>
    %3 = tpu.matmul %1, %2, %cst {dimension_numbers = #tpu.dot_dimension_numbers<[1], [0], [0], [1], [0, 0, 1, 1], [], []>} : vector<16x32xbf16>, vector<32x256xbf16>, vector<16x256xf32> -> vector<16x256xf32>
    %c0_3 = arith.constant 0 : index
    %c0_4 = arith.constant 0 : index
    %4 = vector.load %arg3[%c0_3, %c0_4] : memref<1x256xf32, #tpu.memory_space<vmem>>, vector<1x256xf32>
    %5 = vector.broadcast %4 : vector<1x256xf32> to vector<16x256xf32>
    %6 = arith.addf %3, %5 : vector<16x256xf32>
    %7 = vector.extract_strided_slice %6 {offsets = [0, 0], sizes = [16, 128], strides = [1, 1]} : vector<16x256xf32> to vector<16x128xf32>
    %8 = vector.extract_strided_slice %6 {offsets = [0, 128], sizes = [16, 128], strides = [1, 1]} : vector<16x256xf32> to vector<16x128xf32>
    %cst_5 = arith.constant 0.000000e+00 : f32
    %9 = vector.broadcast %cst_5 : f32 to vector<16x128xf32>
    %10 = arith.maximumf %8, %9 : vector<16x128xf32>
    %11 = arith.truncf %10 : vector<16x128xf32> to vector<16x128xbf16>
    %c0_6 = arith.constant 0 : index
    %c0_7 = arith.constant 0 : index
    %12 = vector.load %arg4[%c0_6, %c0_7] : memref<128x128xbf16, #tpu.memory_space<vmem>>, vector<128x128xbf16>
    %cst_8 = arith.constant dense<0.000000e+00> : vector<16x128xf32>
    %13 = tpu.matmul %11, %12, %cst_8 {dimension_numbers = #tpu.dot_dimension_numbers<[1], [0], [0], [1], [0, 0, 1, 1], [], []>} : vector<16x128xbf16>, vector<128x128xbf16>, vector<16x128xf32> -> vector<16x128xf32>
    %c0_9 = arith.constant 0 : index
    %c0_10 = arith.constant 0 : index
    %14 = vector.load %arg5[%c0_9, %c0_10] : memref<1x128xf32, #tpu.memory_space<vmem>>, vector<1x128xf32>
    %15 = vector.broadcast %14 : vector<1x128xf32> to vector<16x128xf32>
    %16 = arith.addf %13, %15 : vector<16x128xf32>
    %cst_11 = arith.constant 0.000000e+00 : f32
    %17 = vector.broadcast %cst_11 : f32 to vector<16x128xf32>
    %18 = arith.maximumf %16, %17 : vector<16x128xf32>
    %19 = arith.truncf %18 : vector<16x128xf32> to vector<16x128xbf16>
    %c0_12 = arith.constant 0 : index
    %c0_13 = arith.constant 0 : index
    %20 = vector.load %arg6[%c0_12, %c0_13] : memref<128x128xbf16, #tpu.memory_space<vmem>>, vector<128x128xbf16>
    %cst_14 = arith.constant dense<0.000000e+00> : vector<16x128xf32>
    %21 = tpu.matmul %19, %20, %cst_14 {dimension_numbers = #tpu.dot_dimension_numbers<[1], [0], [0], [1], [0, 0, 1, 1], [], []>} : vector<16x128xbf16>, vector<128x128xbf16>, vector<16x128xf32> -> vector<16x128xf32>
    %c0_15 = arith.constant 0 : index
    %c0_16 = arith.constant 0 : index
    %22 = vector.load %arg7[%c0_15, %c0_16] : memref<1x128xf32, #tpu.memory_space<vmem>>, vector<1x128xf32>
    %23 = vector.broadcast %22 : vector<1x128xf32> to vector<16x128xf32>
    %24 = arith.addf %21, %23 : vector<16x128xf32>
    %25 = arith.addf %24, %7 : vector<16x128xf32>
    %cst_17 = arith.constant dense<0.000000e+00> : vector<16xf32>
    %26 = vector.multi_reduction <add>, %25, %cst_17 [1] : vector<16x128xf32> to vector<16xf32>
    %27 = vector.shape_cast %26 : vector<16xf32> to vector<16x1xf32>
    %28 = arith.mulf %25, %25 : vector<16x128xf32>
    %cst_18 = arith.constant dense<0.000000e+00> : vector<16xf32>
    %29 = vector.multi_reduction <add>, %28, %cst_18 [1] : vector<16x128xf32> to vector<16xf32>
    %30 = vector.shape_cast %29 : vector<16xf32> to vector<16x1xf32>
    %cst_19 = arith.constant 1.562500e-02 : f32
    %31 = vector.broadcast %cst_19 : f32 to vector<16x1xf32>
    %32 = arith.mulf %27, %31 : vector<16x1xf32>
    %cst_20 = arith.constant 1.562500e-02 : f32
    %33 = vector.broadcast %cst_20 : f32 to vector<16x1xf32>
    %34 = arith.mulf %30, %33 : vector<16x1xf32>
    %35 = arith.mulf %32, %32 : vector<16x1xf32>
    %36 = arith.subf %34, %35 : vector<16x1xf32>
    %cst_21 = arith.constant 0.000000e+00 : f32
    %37 = vector.broadcast %cst_21 : f32 to vector<16x1xf32>
    %38 = arith.maximumf %36, %37 : vector<16x1xf32>
    %cst_22 = arith.constant 9.99999974E-6 : f32
    %39 = vector.broadcast %cst_22 : f32 to vector<16x1xf32>
    %40 = arith.addf %38, %39 : vector<16x1xf32>
    %41 = math.rsqrt %40 : vector<16x1xf32>
    %42 = vector.broadcast %32 : vector<16x1xf32> to vector<16x128xf32>
    %43 = arith.subf %25, %42 : vector<16x128xf32>
    %44 = vector.broadcast %41 : vector<16x1xf32> to vector<16x128xf32>
    %45 = arith.mulf %43, %44 : vector<16x128xf32>
    %c0_23 = arith.constant 0 : index
    %c0_24 = arith.constant 0 : index
    %46 = vector.load %arg8[%c0_23, %c0_24] : memref<1x128xf32, #tpu.memory_space<vmem>>, vector<1x128xf32>
    %47 = vector.broadcast %46 : vector<1x128xf32> to vector<16x128xf32>
    %48 = arith.mulf %45, %47 : vector<16x128xf32>
    %c0_25 = arith.constant 0 : index
    %c0_26 = arith.constant 0 : index
    %49 = vector.load %arg9[%c0_25, %c0_26] : memref<1x128xf32, #tpu.memory_space<vmem>>, vector<1x128xf32>
    %50 = vector.broadcast %49 : vector<1x128xf32> to vector<16x128xf32>
    %51 = arith.addf %48, %50 : vector<16x128xf32>
    %52 = arith.truncf %51 : vector<16x128xf32> to vector<16x128xbf16>
    %c0_27 = arith.constant 0 : index
    %c0_28 = arith.constant 0 : index
    %53 = vector.load %arg10[%c0_27, %c0_28] : memref<16x128xbf16, #tpu.memory_space<vmem>>, vector<16x128xbf16>
    tpu.vector_store %arg10[%c0_27, %c0_28], %52 {strides = array<i32>} : memref<16x128xbf16, #tpu.memory_space<vmem>>, vector<16x128xbf16>,
    return
  }
  func.func @transform_0(%arg0: i32) -> (i32, i32) {
    %c0_i32 = arith.constant 0 : i32
    %c0_i32_0 = arith.constant 0 : i32
    return %arg0, %c0_i32 : i32, i32
  }
  func.func @transform_1(%arg0: i32) -> (i32, i32) {
    %c0_i32 = arith.constant 0 : i32
    %c0_i32_0 = arith.constant 0 : i32
    %c0_i32_1 = arith.constant 0 : i32
    return %c0_i32, %c0_i32_0 : i32, i32
  }
  func.func @transform_2(%arg0: i32) -> (i32, i32) {
    %c0_i32 = arith.constant 0 : i32
    %c0_i32_0 = arith.constant 0 : i32
    %c0_i32_1 = arith.constant 0 : i32
    return %c0_i32, %c0_i32_0 : i32, i32
  }
  func.func @transform_3(%arg0: i32) -> (i32, i32) {
    %c0_i32 = arith.constant 0 : i32
    %c0_i32_0 = arith.constant 0 : i32
    %c0_i32_1 = arith.constant 0 : i32
    return %c0_i32, %c0_i32_0 : i32, i32
  }
  func.func @transform_4(%arg0: i32) -> (i32, i32) {
    %c0_i32 = arith.constant 0 : i32
    %c0_i32_0 = arith.constant 0 : i32
    %c0_i32_1 = arith.constant 0 : i32
    return %c0_i32, %c0_i32_0 : i32, i32
  }
  func.func @transform_5(%arg0: i32) -> (i32, i32) {
    %c0_i32 = arith.constant 0 : i32
    %c0_i32_0 = arith.constant 0 : i32
    %c0_i32_1 = arith.constant 0 : i32
    return %c0_i32, %c0_i32_0 : i32, i32
  }
  func.func @transform_6(%arg0: i32) -> (i32, i32) {
    %c0_i32 = arith.constant 0 : i32
    %c0_i32_0 = arith.constant 0 : i32
    %c0_i32_1 = arith.constant 0 : i32
    return %c0_i32, %c0_i32_0 : i32, i32
  }
  func.func @transform_7(%arg0: i32) -> (i32, i32) {
    %c0_i32 = arith.constant 0 : i32
    %c0_i32_0 = arith.constant 0 : i32
    %c0_i32_1 = arith.constant 0 : i32
    return %c0_i32, %c0_i32_0 : i32, i32
  }
  func.func @transform_8(%arg0: i32) -> (i32, i32) {
    %c0_i32 = arith.constant 0 : i32
    %c0_i32_0 = arith.constant 0 : i32
    %c0_i32_1 = arith.constant 0 : i32
    return %c0_i32, %c0_i32_0 : i32, i32
  }
  func.func @transform_9(%arg0: i32) -> (i32, i32) {
    %c0_i32 = arith.constant 0 : i32
    %c0_i32_0 = arith.constant 0 : i32
    return %arg0, %c0_i32 : i32, i32
  }
}

module attributes {stable_mosaic.version = 11 : i64} {
  func.func @resblock_kernel(%arg0: i32, %arg1: memref<16x32xf32, #tpu.memory_space<vmem>>, %arg2: memref<32x256xbf16, #tpu.memory_space<vmem>>, %arg3: memref<1x256xf32, #tpu.memory_space<vmem>>, %arg4: memref<128x128xbf16, #tpu.memory_space<vmem>>, %arg5: memref<1x128xf32, #tpu.memory_space<vmem>>, %arg6: memref<128x128xbf16, #tpu.memory_space<vmem>>, %arg7: memref<1x128xf32, #tpu.memory_space<vmem>>, %arg8: memref<1x128xf32, #tpu.memory_space<vmem>>, %arg9: memref<1x128xf32, #tpu.memory_space<vmem>>, %arg10: memref<16x128xbf16, #tpu.memory_space<vmem>>) attributes {dimension_semantics = [#tpu.dimension_semantics<parallel>], iteration_bounds = array<i64: 1>, scalar_prefetch = 0 : i64, scratch_operands = 0 : i64, tpu.core_type = #tpu.core_type<tc>, window_params = [{transform_indices = @transform_0, window_bounds = array<i64: 16, 32>}, {pipeline_mode = #tpu.pipeline_mode<synchronous>, transform_indices = @transform_1, window_bounds = array<i64: 32, 256>}, {pipeline_mode = #tpu.pipeline_mode<synchronous>, transform_indices = @transform_2, window_bounds = array<i64: 1, 256>}, {pipeline_mode = #tpu.pipeline_mode<synchronous>, transform_indices = @transform_3, window_bounds = array<i64: 128, 128>}, {pipeline_mode = #tpu.pipeline_mode<synchronous>, transform_indices = @transform_4, window_bounds = array<i64: 1, 128>}, {pipeline_mode = #tpu.pipeline_mode<synchronous>, transform_indices = @transform_5, window_bounds = array<i64: 128, 128>}, {pipeline_mode = #tpu.pipeline_mode<synchronous>, transform_indices = @transform_6, window_bounds = array<i64: 1, 128>}, {pipeline_mode = #tpu.pipeline_mode<synchronous>, transform_indices = @transform_7, window_bounds = array<i64: 1, 128>}, {pipeline_mode = #tpu.pipeline_mode<synchronous>, transform_indices = @transform_8, window_bounds = array<i64: 1, 128>}, {transform_indices = @transform_9, window_bounds = array<i64: 16, 128>}]} {
    %c0 = arith.constant 0 : index
    %c0_0 = arith.constant 0 : index
    %0 = vector.load %arg1[%c0, %c0_0] : memref<16x32xf32, #tpu.memory_space<vmem>>, vector<16x32xf32>
    %1 = arith.truncf %0 : vector<16x32xf32> to vector<16x32xbf16>
    %c0_1 = arith.constant 0 : index
    %c0_2 = arith.constant 0 : index
    %2 = vector.load %arg2[%c0_1, %c0_2] : memref<32x256xbf16, #tpu.memory_space<vmem>>, vector<32x256xbf16>
    %cst = arith.constant dense<0.000000e+00> : vector<16x256xf32>
    %3 = tpu.matmul %1, %2, %cst {dimension_numbers = #tpu.dot_dimension_numbers<[1], [0], [0], [1], [0, 0, 1, 1], [], []>} : vector<16x32xbf16>, vector<32x256xbf16>, vector<16x256xf32> -> vector<16x256xf32>
    %c0_3 = arith.constant 0 : index
    %c0_4 = arith.constant 0 : index
    %4 = vector.load %arg3[%c0_3, %c0_4] : memref<1x256xf32, #tpu.memory_space<vmem>>, vector<1x256xf32>
    %5 = vector.broadcast %4 : vector<1x256xf32> to vector<16x256xf32>
    %6 = arith.addf %3, %5 : vector<16x256xf32>
    %7 = vector.extract_strided_slice %6 {offsets = [0, 0], sizes = [16, 128], strides = [1, 1]} : vector<16x256xf32> to vector<16x128xf32>
    %8 = vector.extract_strided_slice %6 {offsets = [0, 128], sizes = [16, 128], strides = [1, 1]} : vector<16x256xf32> to vector<16x128xf32>
    %cst_5 = arith.constant 0.000000e+00 : f32
    %9 = vector.broadcast %cst_5 : f32 to vector<16x128xf32>
    %10 = arith.maximumf %8, %9 : vector<16x128xf32>
    %11 = arith.truncf %10 : vector<16x128xf32> to vector<16x128xbf16>
    %c0_6 = arith.constant 0 : index
    %c0_7 = arith.constant 0 : index
    %12 = vector.load %arg4[%c0_6, %c0_7] : memref<128x128xbf16, #tpu.memory_space<vmem>>, vector<128x128xbf16>
    %cst_8 = arith.constant dense<0.000000e+00> : vector<16x128xf32>
    %13 = tpu.matmul %11, %12, %cst_8 {dimension_numbers = #tpu.dot_dimension_numbers<[1], [0], [0], [1], [0, 0, 1, 1], [], []>} : vector<16x128xbf16>, vector<128x128xbf16>, vector<16x128xf32> -> vector<16x128xf32>
    %c0_9 = arith.constant 0 : index
    %c0_10 = arith.constant 0 : index
    %14 = vector.load %arg5[%c0_9, %c0_10] : memref<1x128xf32, #tpu.memory_space<vmem>>, vector<1x128xf32>
    %15 = vector.broadcast %14 : vector<1x128xf32> to vector<16x128xf32>
    %16 = arith.addf %13, %15 : vector<16x128xf32>
    %cst_11 = arith.constant 0.000000e+00 : f32
    %17 = vector.broadcast %cst_11 : f32 to vector<16x128xf32>
    %18 = arith.maximumf %16, %17 : vector<16x128xf32>
    %19 = arith.truncf %18 : vector<16x128xf32> to vector<16x128xbf16>
    %c0_12 = arith.constant 0 : index
    %c0_13 = arith.constant 0 : index
    %20 = vector.load %arg6[%c0_12, %c0_13] : memref<128x128xbf16, #tpu.memory_space<vmem>>, vector<128x128xbf16>
    %cst_14 = arith.constant dense<0.000000e+00> : vector<16x128xf32>
    %21 = tpu.matmul %19, %20, %cst_14 {dimension_numbers = #tpu.dot_dimension_numbers<[1], [0], [0], [1], [0, 0, 1, 1], [], []>} : vector<16x128xbf16>, vector<128x128xbf16>, vector<16x128xf32> -> vector<16x128xf32>
    %c0_15 = arith.constant 0 : index
    %c0_16 = arith.constant 0 : index
    %22 = vector.load %arg7[%c0_15, %c0_16] : memref<1x128xf32, #tpu.memory_space<vmem>>, vector<1x128xf32>
    %23 = vector.broadcast %22 : vector<1x128xf32> to vector<16x128xf32>
    %24 = arith.addf %21, %23 : vector<16x128xf32>
    %25 = arith.addf %24, %7 : vector<16x128xf32>
    %cst_17 = arith.constant dense<0.000000e+00> : vector<16xf32>
    %26 = vector.multi_reduction <add>, %25, %cst_17 [1] : vector<16x128xf32> to vector<16xf32>
    %27 = vector.shape_cast %26 : vector<16xf32> to vector<16x1xf32>
    %28 = arith.mulf %25, %25 : vector<16x128xf32>
    %cst_18 = arith.constant dense<0.000000e+00> : vector<16xf32>
    %29 = vector.multi_reduction <add>, %28, %cst_18 [1] : vector<16x128xf32> to vector<16xf32>
    %30 = vector.shape_cast %29 : vector<16xf32> to vector<16x1xf32>
    %cst_19 = arith.constant 1.562500e-02 : f32
    %31 = vector.broadcast %cst_19 : f32 to vector<16x1xf32>
    %32 = arith.mulf %27, %31 : vector<16x1xf32>
    %cst_20 = arith.constant 1.562500e-02 : f32
    %33 = vector.broadcast %cst_20 : f32 to vector<16x1xf32>
    %34 = arith.mulf %30, %33 : vector<16x1xf32>
    %35 = arith.mulf %32, %32 : vector<16x1xf32>
    %36 = arith.subf %34, %35 : vector<16x1xf32>
    %cst_21 = arith.constant 0.000000e+00 : f32
    %37 = vector.broadcast %cst_21 : f32 to vector<16x1xf32>
    %38 = arith.maximumf %36, %37 : vector<16x1xf32>
    %cst_22 = arith.constant 9.99999974E-6 : f32
    %39 = vector.broadcast %cst_22 : f32 to vector<16x1xf32>
    %40 = arith.addf %38, %39 : vector<16x1xf32>
    %41 = math.rsqrt %40 : vector<16x1xf32>
    %42 = vector.broadcast %32 : vector<16x1xf32> to vector<16x128xf32>
    %43 = arith.subf %25, %42 : vector<16x128xf32>
    %44 = vector.broadcast %41 : vector<16x1xf32> to vector<16x128xf32>
    %45 = arith.mulf %43, %44 : vector<16x128xf32>
    %c0_23 = arith.constant 0 : index
    %c0_24 = arith.constant 0 : index
    %46 = vector.load %arg8[%c0_23, %c0_24] : memref<1x128xf32, #tpu.memory_space<vmem>>, vector<1x128xf32>
    %47 = vector.broadcast %46 : vector<1x128xf32> to vector<16x128xf32>
    %48 = arith.mulf %45, %47 : vector<16x128xf32>
    %c0_25 = arith.constant 0 : index
    %c0_26 = arith.constant 0 : index
    %49 = vector.load %arg9[%c0_25, %c0_26] : memref<1x128xf32, #tpu.memory_space<vmem>>, vector<1x128xf32>
    %50 = vector.broadcast %49 : vector<1x128xf32> to vector<16x128xf32>
    %51 = arith.addf %48, %50 : vector<16x128xf32>
    %52 = arith.truncf %51 : vector<16x128xf32> to vector<16x128xbf16>
    %c0_27 = arith.constant 0 : index
    %c0_28 = arith.constant 0 : index
    %53 = vector.load %arg10[%c0_27, %c0_28] : memref<16x128xbf16, #tpu.memory_space<vmem>>, vector<16x128xbf16>
    tpu.vector_store %arg10[%c0_27, %c0_28], %52 {strides = array<i32>} : memref<16x128xbf16, #tpu.memory_space<vmem>>, vector<16x128xbf16>,
    return
  }
  func.func @transform_0(%arg0: i32) -> (i32, i32) {
    %c0_i32 = arith.constant 0 : i32
    %c0_i32_0 = arith.constant 0 : i32
    return %arg0, %c0_i32 : i32, i32
  }
  func.func @transform_1(%arg0: i32) -> (i32, i32) {
    %c0_i32 = arith.constant 0 : i32
    %c0_i32_0 = arith.constant 0 : i32
    %c0_i32_1 = arith.constant 0 : i32
    return %c0_i32, %c0_i32_0 : i32, i32
  }
  func.func @transform_2(%arg0: i32) -> (i32, i32) {
    %c0_i32 = arith.constant 0 : i32
    %c0_i32_0 = arith.constant 0 : i32
    %c0_i32_1 = arith.constant 0 : i32
    return %c0_i32, %c0_i32_0 : i32, i32
  }
  func.func @transform_3(%arg0: i32) -> (i32, i32) {
    %c0_i32 = arith.constant 0 : i32
    %c0_i32_0 = arith.constant 0 : i32
    %c0_i32_1 = arith.constant 0 : i32
    return %c0_i32, %c0_i32_0 : i32, i32
  }
  func.func @transform_4(%arg0: i32) -> (i32, i32) {
    %c0_i32 = arith.constant 0 : i32
    %c0_i32_0 = arith.constant 0 : i32
    %c0_i32_1 = arith.constant 0 : i32
    return %c0_i32, %c0_i32_0 : i32, i32
  }
  func.func @transform_5(%arg0: i32) -> (i32, i32) {
    %c0_i32 = arith.constant 0 : i32
    %c0_i32_0 = arith.constant 0 : i32
    %c0_i32_1 = arith.constant 0 : i32
    return %c0_i32, %c0_i32_0 : i32, i32
  }
  func.func @transform_6(%arg0: i32) -> (i32, i32) {
    %c0_i32 = arith.constant 0 : i32
    %c0_i32_0 = arith.constant 0 : i32
    %c0_i32_1 = arith.constant 0 : i32
    return %c0_i32, %c0_i32_0 : i32, i32
  }
  func.func @transform_7(%arg0: i32) -> (i32, i32) {
    %c0_i32 = arith.constant 0 : i32
    %c0_i32_0 = arith.constant 0 : i32
    %c0_i32_1 = arith.constant 0 : i32
    return %c0_i32, %c0_i32_0 : i32, i32
  }
  func.func @transform_8(%arg0: i32) -> (i32, i32) {
    %c0_i32 = arith.constant 0 : i32
    %c0_i32_0 = arith.constant 0 : i32
    %c0_i32_1 = arith.constant 0 : i32
    return %c0_i32, %c0_i32_0 : i32, i32
  }
  func.func @transform_9(%arg0: i32) -> (i32, i32) {
    %c0_i32 = arith.constant 0 : i32
    %c0_i32_0 = arith.constant 0 : i32
    return %arg0, %c0_i32 : i32, i32
  }
}

</mosaic_0001>

<llo_original>
// kernel: tpu_custom_call.1
$region0: #{tpu_custom_call.1}
  #allocation0 [shape = 'u32[]', space=smem, size = 0x4, offset = 0x4, fixed_abs, tag = 'smem constant byte address 0x4 - core index']
  #allocation1 [shape = 'u32[144,128]{1,0:T(1,128)}', space=vmem, size = 0x12000, scoped, tag = 'internal scratch']
  %s0 = inlined_call_operand.hbm [shape: f32[16,32], index: 0, kind: input, shape index: {}]
  %s1 = inlined_call_operand.hbm [shape: bf16[32,256], index: 1, kind: input, shape index: {}]
  %s2 = inlined_call_operand.vmem [shape: f32[1,256], index: 2, kind: input, shape index: {}]
  %s3 = inlined_call_operand.hbm [shape: bf16[128,128], index: 3, kind: input, shape index: {}]
  %s4 = inlined_call_operand.vmem [shape: f32[1,128], index: 4, kind: input, shape index: {}]
  %s5 = inlined_call_operand.hbm [shape: bf16[128,128], index: 5, kind: input, shape index: {}]
  %s6 = inlined_call_operand.vmem [shape: f32[1,128], index: 6, kind: input, shape index: {}]
  %s7 = inlined_call_operand.vmem [shape: f32[1,128], index: 7, kind: input, shape index: {}]
  %s8 = inlined_call_operand.vmem [shape: f32[1,128], index: 8, kind: input, shape index: {}]
  %s9 = inlined_call_operand.hbm [shape: bf16[16,128], index: 9, kind: output, shape index: {}]
  %s10 = sld [smem:[#allocation0]]
  $region62: #{tpu_custom_call.1} parent=0
    _
  %s12 = ssub.s32 1, %s10
  %s13 = scalar_select 0, %s12, %s10
  $region1: #{tpu_custom_call.1} parent=0
    #allocation2 [shape = 'u8[8192]{0}', space=vmem, size = 0x2000, scoped, tag = 'input window, operand 0, single buffered']
    #allocation3 [shape = 's32[1]{0}', space=sflag, size = 0x4, scoped, tag = 'scoped memory for tpu_custom_call.1']
    #allocation4 [shape = 's32[1]{0}', space=sflag, size = 0x4, scoped, tag = 'scoped memory for tpu_custom_call.1']
    #allocation5 [shape = 'u8[16384]{0}', space=vmem, size = 0x4000, scoped, tag = 'input window, operand 1, single buffered']
    #allocation6 [shape = 's32[1]{0}', space=sflag, size = 0x4, scoped, tag = 'scoped memory for tpu_custom_call.1']
    #allocation7 [shape = 'u8[32768]{0}', space=vmem, size = 0x8000, scoped, tag = 'input window, operand 3, single buffered']
    #allocation8 [shape = 'u8[32768]{0}', space=vmem, size = 0x8000, scoped, tag = 'input window, operand 5, single buffered']
    #allocation9 [shape = 's32[1]{0}', space=sflag, size = 0x4, scoped, tag = 'scoped memory for tpu_custom_call.1']
    #allocation10 [shape = 'u8[4096]{0}', space=vmem, size = 0x1000, scoped, tag = 'output window, operand 0, single buffered']
    %14 = vsyncpa [#allocation3], 0
    %15 = vsyncpa [#allocation6], 0
    %16 = vsyncpa [#allocation9], 0
    %17 = vsyncpa [#allocation4], 0
    // Predicated region
    $region2: #{tpu_custom_call.1} parent=1 // pred_check
      _
    $region3: #{tpu_custom_call.1} parent=1 // pred_check_branch
      %19 = sbr.rel (0) target = $region5
    $region4: #{tpu_custom_call.1} parent=1 // pred_region
      %s21 = ssub.s32 256, 256
      %22 = vsyncadd [#allocation3], %s21
      %s23 = sshll.u32 [#allocation2], 4
      %s24 = int_to_ptr.vmem [resolvable:$true] %s23
      %29 = dma.hbm_to_vmem [thread:$0]  %s0, 256, %s24, [#allocation3], 128, 128, 8
    $region5: #{tpu_custom_call.1} parent=1 // pred_fallthru
      _
    // Predicated region
    $region6: #{tpu_custom_call.1} parent=1 // pred_check
      _
    $region7: #{tpu_custom_call.1} parent=1 // pred_check_branch
      %31 = sbr.rel (0) target = $region9
    $region8: #{tpu_custom_call.1} parent=1 // pred_region
      %s33 = ssub.s32 512, 512
      %34 = vsyncadd [#allocation6], %s33
      %s35 = sshll.u32 [#allocation5], 4
      %s36 = int_to_ptr.vmem [resolvable:$true] %s35
      %41 = dma.hbm_to_vmem [thread:$0]  %s1, 512, %s36, [#allocation6], 128, 128, 8
    $region9: #{tpu_custom_call.1} parent=1 // pred_fallthru
      _
    // Predicated region
    $region10: #{tpu_custom_call.1} parent=1 // pred_check
      _
    $region11: #{tpu_custom_call.1} parent=1 // pred_check_branch
      %43 = sbr.rel (0) target = $region13
    $region12: #{tpu_custom_call.1} parent=1 // pred_region
      _
    $region13: #{tpu_custom_call.1} parent=1 // pred_fallthru
      _
    // Predicated region
    $region14: #{tpu_custom_call.1} parent=1 // pred_check
      _
    $region15: #{tpu_custom_call.1} parent=1 // pred_check_branch
      %45 = sbr.rel (0) target = $region17
    $region16: #{tpu_custom_call.1} parent=1 // pred_region
      %s47 = ssub.s32 1024, 1024
      %48 = vsyncadd [#allocation6], %s47
      %s49 = sshll.u32 [#allocation7], 4
      %s50 = int_to_ptr.vmem [resolvable:$true] %s49
      %55 = dma.hbm_to_vmem [thread:$0]  %s3, 1024, %s50, [#allocation6], 64, 64, 4
    $region17: #{tpu_custom_call.1} parent=1 // pred_fallthru
      _
    // Predicated region
    $region18: #{tpu_custom_call.1} parent=1 // pred_check
      _
    $region19: #{tpu_custom_call.1} parent=1 // pred_check_branch
      %57 = sbr.rel (0) target = $region21
    $region20: #{tpu_custom_call.1} parent=1 // pred_region
      _
    $region21: #{tpu_custom_call.1} parent=1 // pred_fallthru
      _
    // Predicated region
    $region22: #{tpu_custom_call.1} parent=1 // pred_check
      _
    $region23: #{tpu_custom_call.1} parent=1 // pred_check_branch
      %59 = sbr.rel (0) target = $region25
    $region24: #{tpu_custom_call.1} parent=1 // pred_region
      %s61 = ssub.s32 1024, 1024
      %62 = vsyncadd [#allocation9], %s61
      %s63 = sshll.u32 [#allocation8], 4
      %s64 = int_to_ptr.vmem [resolvable:$true] %s63
      %69 = dma.hbm_to_vmem [thread:$0]  %s5, 1024, %s64, [#allocation9], 64, 64, 4
    $region25: #{tpu_custom_call.1} parent=1 // pred_fallthru
      _
    // Predicated region
    $region26: #{tpu_custom_call.1} parent=1 // pred_check
      _
    $region27: #{tpu_custom_call.1} parent=1 // pred_check_branch
      %71 = sbr.rel (0) target = $region29
    $region28: #{tpu_custom_call.1} parent=1 // pred_region
      _
    $region29: #{tpu_custom_call.1} parent=1 // pred_fallthru
      _
    // Predicated region
    $region30: #{tpu_custom_call.1} parent=1 // pred_check
      _
    $region31: #{tpu_custom_call.1} parent=1 // pred_check_branch
      %73 = sbr.rel (0) target = $region33
    $region32: #{tpu_custom_call.1} parent=1 // pred_region
      _
    $region33: #{tpu_custom_call.1} parent=1 // pred_fallthru
      _
    // Predicated region
    $region34: #{tpu_custom_call.1} parent=1 // pred_check
      _
    $region35: #{tpu_custom_call.1} parent=1 // pred_check_branch
      %75 = sbr.rel (0) target = $region37
    $region36: #{tpu_custom_call.1} parent=1 // pred_region
      _
    $region37: #{tpu_custom_call.1} parent=1 // pred_fallthru
      _
    // Predicated region
    $region38: #{tpu_custom_call.1} parent=1 // pred_check
      _
    $region39: #{tpu_custom_call.1} parent=1 // pred_check_branch
      %77 = sbr.rel (0) target = $region41
    $region40: #{tpu_custom_call.1} parent=1 // pred_region
      %78 = dma.done [#allocation3], 256
    $region41: #{tpu_custom_call.1} parent=1 // pred_fallthru
      _
    // Predicated region
    $region42: #{tpu_custom_call.1} parent=1 // pred_check
      _
    $region43: #{tpu_custom_call.1} parent=1 // pred_check_branch
      %80 = sbr.rel (0) target = $region45
    $region44: #{tpu_custom_call.1} parent=1 // pred_region
      %81 = dma.done [#allocation6], 512
    $region45: #{tpu_custom_call.1} parent=1 // pred_fallthru
      _
    // Predicated region
    $region46: #{tpu_custom_call.1} parent=1 // pred_check
      _
    $region47: #{tpu_custom_call.1} parent=1 // pred_check_branch
      %83 = sbr.rel (0) target = $region49
    $region48: #{tpu_custom_call.1} parent=1 // pred_region
      %84 = dma.done [#allocation6], 1024
    $region49: #{tpu_custom_call.1} parent=1 // pred_fallthru
      _
    // Predicated region
    $region50: #{tpu_custom_call.1} parent=1 // pred_check
      _
    $region51: #{tpu_custom_call.1} parent=1 // pred_check_branch
      %86 = sbr.rel (0) target = $region53
    $region52: #{tpu_custom_call.1} parent=1 // pred_region
      %87 = dma.done [#allocation9], 1024
    $region53: #{tpu_custom_call.1} parent=1 // pred_fallthru
      _
    %v89 = vld [vmem:[#allocation2] sm:$0xff]
    %v90 = vld [vmem:[#allocation2 + $0x8] sm:$0xff]
    %v91 = vpack.c.bf16 %v90, %v89
    %v92 = vld [vmem:[#allocation5] sm:$0xff]
    %v93 = vld [vmem:[#allocation5 + $0x8] sm:$0xff]
    %v94 = vld [vmem:[#allocation5 + $0x10] sm:$0xff]
    %v95 = vld [vmem:[#allocation5 + $0x18] sm:$0xff]
    %v96 = vld [vmem:[%s2] sm:$0x3]
    %v98 = vlaneseq
    %v99 = vshrl.u32 %v98, 7
    %v100 = vsub.s32 0, %v99
    %v101 = vrot.slane %v96, %v100
    %v102 = vlaneseq
    %v103 = vshrl.u32 %v102, 7
    %v104 = vsub.s32 1, %v103
    %v105 = vrot.slane %v96, %v104
    %v112 = vunpack.c.l.b16 %v92
    %v113 = vunpack.c.h.b16 %v92
    %v114 = vunpack.c.l.b16 %v93
    %v115 = vunpack.c.h.b16 %v93
    %v116 = vunpack.c.l.b16 %v94
    %v117 = vunpack.c.h.b16 %v94
    %v118 = vunpack.c.l.b16 %v95
    %v119 = vunpack.c.h.b16 %v95
    %v120 = vpack.c.b16 %v114, %v112
    %v121 = vpack.c.b16 %v115, %v113
    %v122 = vpack.c.b16 %v118, %v116
    %v123 = vpack.c.b16 %v119, %v117
    %vm128 = vcmask 261120
    %v130 = vsel %vm128, %v91, 0
    %132 = vmatprep.subr.bf16.mxu0 %v121
    %133 = vmatpush1.bf16.msra.mxu0 %v120
    %134 = vmatprep.subr.bf16.mxu0 %v123
    %135 = vmatpush1.bf16.msra.mxu0 %v122
    %136 = vmatprep.subr.bf16.mxu0 0
    %137 = vmatpush1.bf16.msra.mxu0 0
    %138 = vmatprep.subr.bf16.mxu0 0
    %139 = vmatpush1.bf16.msra.mxu0 0
    %140 = vmatprep.subr.bf16.mxu0 0
    %141 = vmatpush1.bf16.msra.mxu0 0
    %142 = vmatprep.subr.bf16.mxu0 0
    %143 = vmatpush1.bf16.msra.mxu0 0
    %144 = vmatprep.subr.bf16.mxu0 0
    %145 = vmatpush1.bf16.msra.mxu0 0
    %146 = vmatprep.subr.bf16.mxu0 0
    %147 = vmatpush1.bf16.msra.mxu0 0
    %148 = vmatprep.subr.bf16.mxu0 0
    %149 = vmatpush1.bf16.msra.mxu0 0
    %150 = vmatprep.subr.bf16.mxu0 0
    %151 = vmatpush1.bf16.msra.mxu0 0
    %152 = vmatprep.subr.bf16.mxu0 0
    %153 = vmatpush1.bf16.msra.mxu0 0
    %154 = vmatprep.subr.bf16.mxu0 0
    %155 = vmatpush1.bf16.msra.mxu0 0
    %156 = vmatprep.subr.bf16.mxu0 0
    %157 = vmatpush1.bf16.msra.mxu0 0
    %158 = vmatprep.subr.bf16.mxu0 0
    %159 = vmatpush1.bf16.msra.mxu0 0
    %160 = vmatprep.subr.bf16.mxu0 0
    %161 = vmatpush1.bf16.msra.mxu0 0
    %162 = vmatprep.subr.bf16.mxu0 0
    %163 = vmatpush1.bf16.msra.mxu0 0
    %164 = vmatprep.mubr.bf16.mxu0 0
    %165 = vmatmul.mubr.bf16.gmra.mrb[0].mxu0 %v130
    %v166 = vpop.f32.mrb[0].mxu0
    %v167 = vadd.f32 %v101, %v166
    %v168 = vpop.f32.mrb[0].mxu0
    %v169 = vadd.f32 %v105, %v168
    %v170 = vpop.f32.mrb[0].mxu0
    %v171 = vadd.f32 %v101, %v170
    %v172 = vpop.f32.mrb[0].mxu0
    %v173 = vadd.f32 %v105, %v172
    %174 = vdwg.mxu0
    %v175 = vmax.f32 %v169, 0.0
    %v176 = vmax.f32 %v173, 0.0
    %v177 = vpack.c.bf16 %v176, %v175
    %v178 = vld [vmem:[#allocation7] sm:$0xf]
    %v179 = vld [vmem:[#allocation7 + $0x4] sm:$0xf]
    %v180 = vld [vmem:[#allocation7 + $0x8] sm:$0xf]
    %v181 = vld [vmem:[#allocation7 + $0xc] sm:$0xf]
    %v182 = vld [vmem:[#allocation7 + $0x10] sm:$0xf]
    %v183 = vld [vmem:[#allocation7 + $0x14] sm:$0xf]
    %v184 = vld [vmem:[#allocation7 + $0x18] sm:$0xf]
    %v185 = vld [vmem:[#allocation7 + $0x1c] sm:$0xf]
    %v186 = vld [vmem:[#allocation7 + $0x20] sm:$0xf]
    %v187 = vld [vmem:[#allocation7 + $0x24] sm:$0xf]
    %v188 = vld [vmem:[#allocation7 + $0x28] sm:$0xf]
    %v189 = vld [vmem:[#allocation7 + $0x2c] sm:$0xf]
    %v190 = vld [vmem:[#allocation7 + $0x30] sm:$0xf]
    %v191 = vld [vmem:[#allocation7 + $0x34] sm:$0xf]
    %v192 = vld [vmem:[#allocation7 + $0x38] sm:$0xf]
    %v193 = vld [vmem:[#allocation7 + $0x3c] sm:$0xf]
    %v194 = vld [vmem:[%s4] sm:$0x1]
    %v196 = vlaneseq
    %v197 = vshrl.u32 %v196, 7
    %v198 = vsub.s32 0, %v197
    %v199 = vrot.slane %v194, %v198
    %v217 = vunpack.c.l.b16 %v178
    %v218 = vunpack.c.l.b16 %v179
    %v219 = vunpack.c.l.b16 %v180
    %v220 = vunpack.c.l.b16 %v181
    %v221 = vunpack.c.l.b16 %v182
    %v222 = vunpack.c.l.b16 %v183
    %v223 = vunpack.c.l.b16 %v184
    %v224 = vunpack.c.l.b16 %v185
    %v225 = vunpack.c.l.b16 %v186
    %v226 = vunpack.c.l.b16 %v187
    %v227 = vunpack.c.l.b16 %v188
    %v228 = vunpack.c.l.b16 %v189
    %v229 = vunpack.c.l.b16 %v190
    %v230 = vunpack.c.l.b16 %v191
    %v231 = vunpack.c.l.b16 %v192
    %v232 = vunpack.c.l.b16 %v193
    %v233 = vpack.c.b16 %v218, %v217
    %v234 = vpack.c.b16 %v220, %v219
    %v235 = vpack.c.b16 %v222, %v221
    %v236 = vpack.c.b16 %v224, %v223
    %v237 = vpack.c.b16 %v226, %v225
    %v238 = vpack.c.b16 %v228, %v227
    %v239 = vpack.c.b16 %v230, %v229
    %v240 = vpack.c.b16 %v232, %v231
    %249 = vmatprep.subr.bf16.mxu0 0
    %250 = vmatpush1.bf16.msra.mxu0 %v233
    %251 = vmatprep.subr.bf16.mxu0 0
    %252 = vmatpush1.bf16.msra.mxu0 %v234
    %253 = vmatprep.subr.bf16.mxu0 0
    %254 = vmatpush1.bf16.msra.mxu0 %v235
    %255 = vmatprep.subr.bf16.mxu0 0
    %256 = vmatpush1.bf16.msra.mxu0 %v236
    %257 = vmatprep.subr.bf16.mxu0 0
    %258 = vmatpush1.bf16.msra.mxu0 %v237
    %259 = vmatprep.subr.bf16.mxu0 0
    %260 = vmatpush1.bf16.msra.mxu0 %v238
    %261 = vmatprep.subr.bf16.mxu0 0
    %262 = vmatpush1.bf16.msra.mxu0 %v239
    %263 = vmatprep.subr.bf16.mxu0 0
    %264 = vmatpush1.bf16.msra.mxu0 %v240
    %265 = vmatprep.subr.bf16.mxu0 0
    %266 = vmatpush1.bf16.msra.mxu0 0
    %267 = vmatprep.subr.bf16.mxu0 0
    %268 = vmatpush1.bf16.msra.mxu0 0
    %269 = vmatprep.subr.bf16.mxu0 0
    %270 = vmatpush1.bf16.msra.mxu0 0
    %271 = vmatprep.subr.bf16.mxu0 0
    %272 = vmatpush1.bf16.msra.mxu0 0
    %273 = vmatprep.subr.bf16.mxu0 0
    %274 = vmatpush1.bf16.msra.mxu0 0
    %275 = vmatprep.subr.bf16.mxu0 0
    %276 = vmatpush1.bf16.msra.mxu0 0
    %277 = vmatprep.subr.bf16.mxu0 0
    %278 = vmatpush1.bf16.msra.mxu0 0
    %279 = vmatprep.subr.bf16.mxu0 0
    %280 = vmatpush1.bf16.msra.mxu0 0
    %281 = vmatprep.mubr.bf16.mxu0 0
    %282 = vmatmul.mubr.bf16.gmra.mrb[0].mxu0 %v177
    %v283 = vpop.f32.mrb[0].mxu0
    %v284 = vadd.f32 %v199, %v283
    %v285 = vpop.f32.mrb[0].mxu0
    %v286 = vpop.f32.mrb[0].mxu0
    %v287 = vadd.f32 %v199, %v286
    %v288 = vpop.f32.mrb[0].mxu0
    %289 = vdwg.mxu0
    %v290 = vmax.f32 %v284, 0.0
    %v291 = vmax.f32 %v287, 0.0
    %v292 = vpack.c.bf16 %v291, %v290
    %v293 = vld [vmem:[#allocation8] sm:$0xf]
    %v294 = vld [vmem:[#allocation8 + $0x4] sm:$0xf]
    %v295 = vld [vmem:[#allocation8 + $0x8] sm:$0xf]
    %v296 = vld [vmem:[#allocation8 + $0xc] sm:$0xf]
    %v297 = vld [vmem:[#allocation8 + $0x10] sm:$0xf]
    %v298 = vld [vmem:[#allocation8 + $0x14] sm:$0xf]
    %v299 = vld [vmem:[#allocation8 + $0x18] sm:$0xf]
    %v300 = vld [vmem:[#allocation8 + $0x1c] sm:$0xf]
    %v301 = vld [vmem:[#allocation8 + $0x20] sm:$0xf]
    %v302 = vld [vmem:[#allocation8 + $0x24] sm:$0xf]
    %v303 = vld [vmem:[#allocation8 + $0x28] sm:$0xf]
    %v304 = vld [vmem:[#allocation8 + $0x2c] sm:$0xf]
    %v305 = vld [vmem:[#allocation8 + $0x30] sm:$0xf]
    %v306 = vld [vmem:[#allocation8 + $0x34] sm:$0xf]
    %v307 = vld [vmem:[#allocation8 + $0x38] sm:$0xf]
    %v308 = vld [vmem:[#allocation8 + $0x3c] sm:$0xf]
    %v309 = vld [vmem:[%s6] sm:$0x1]
    %v311 = vlaneseq
    %v312 = vshrl.u32 %v311, 7
    %v313 = vsub.s32 0, %v312
    %v314 = vrot.slane %v309, %v313
    %v332 = vunpack.c.l.b16 %v293
    %v333 = vunpack.c.l.b16 %v294
    %v334 = vunpack.c.l.b16 %v295
    %v335 = vunpack.c.l.b16 %v296
    %v336 = vunpack.c.l.b16 %v297
    %v337 = vunpack.c.l.b16 %v298
    %v338 = vunpack.c.l.b16 %v299
    %v339 = vunpack.c.l.b16 %v300
    %v340 = vunpack.c.l.b16 %v301
    %v341 = vunpack.c.l.b16 %v302
    %v342 = vunpack.c.l.b16 %v303
    %v343 = vunpack.c.l.b16 %v304
    %v344 = vunpack.c.l.b16 %v305
    %v345 = vunpack.c.l.b16 %v306
    %v346 = vunpack.c.l.b16 %v307
    %v347 = vunpack.c.l.b16 %v308
    %v348 = vpack.c.b16 %v333, %v332
    %v349 = vpack.c.b16 %v335, %v334
    %v350 = vpack.c.b16 %v337, %v336
    %v351 = vpack.c.b16 %v339, %v338
    %v352 = vpack.c.b16 %v341, %v340
    %v353 = vpack.c.b16 %v343, %v342
    %v354 = vpack.c.b16 %v345, %v344
    %v355 = vpack.c.b16 %v347, %v346
    %364 = vmatprep.subr.bf16.mxu0 0
    %365 = vmatpush1.bf16.msra.mxu0 %v348
    %366 = vmatprep.subr.bf16.mxu0 0
    %367 = vmatpush1.bf16.msra.mxu0 %v349
    %368 = vmatprep.subr.bf16.mxu0 0
    %369 = vmatpush1.bf16.msra.mxu0 %v350
    %370 = vmatprep.subr.bf16.mxu0 0
    %371 = vmatpush1.bf16.msra.mxu0 %v351
    %372 = vmatprep.subr.bf16.mxu0 0
    %373 = vmatpush1.bf16.msra.mxu0 %v352
    %374 = vmatprep.subr.bf16.mxu0 0
    %375 = vmatpush1.bf16.msra.mxu0 %v353
    %376 = vmatprep.subr.bf16.mxu0 0
    %377 = vmatpush1.bf16.msra.mxu0 %v354
    %378 = vmatprep.subr.bf16.mxu0 0
    %379 = vmatpush1.bf16.msra.mxu0 %v355
    %380 = vmatprep.subr.bf16.mxu0 0
    %381 = vmatpush1.bf16.msra.mxu0 0
    %382 = vmatprep.subr.bf16.mxu0 0
    %383 = vmatpush1.bf16.msra.mxu0 0
    %384 = vmatprep.subr.bf16.mxu0 0
    %385 = vmatpush1.bf16.msra.mxu0 0
    %386 = vmatprep.subr.bf16.mxu0 0
    %387 = vmatpush1.bf16.msra.mxu0 0
    %388 = vmatprep.subr.bf16.mxu0 0
    %389 = vmatpush1.bf16.msra.mxu0 0
    %390 = vmatprep.subr.bf16.mxu0 0
    %391 = vmatpush1.bf16.msra.mxu0 0
    %392 = vmatprep.subr.bf16.mxu0 0
    %393 = vmatpush1.bf16.msra.mxu0 0
    %394 = vmatprep.subr.bf16.mxu0 0
    %395 = vmatpush1.bf16.msra.mxu0 0
    %396 = vmatprep.mubr.bf16.mxu0 0
    %397 = vmatmul.mubr.bf16.gmra.mrb[0].mxu0 %v292
    %v398 = vpop.f32.mrb[0].mxu0
    %v399 = vadd.f32 %v314, %v398
    %v400 = vpop.f32.mrb[0].mxu0
    %v401 = vpop.f32.mrb[0].mxu0
    %v402 = vadd.f32 %v314, %v401
    %v403 = vpop.f32.mrb[0].mxu0
    %404 = vdwg.mxu0
    %v405 = vadd.f32 %v399, %v167
    %v406 = vadd.f32 %v402, %v171
    %407 = vadd.xlane.f32.xlu0 %v405
    %v408 = vpop.xlane.xlu0 %407
    %409 = vadd.xlane.f32.xlu0 %v406
    %v410 = vpop.xlane.xlu0 %409
    %v411 = vmul.f32 %v405, %v405
    %v412 = vmul.f32 %v406, %v406
    %413 = vadd.xlane.f32.xlu0 %v411
    %v414 = vpop.xlane.xlu0 %413
    %415 = vadd.xlane.f32.xlu0 %v412
    %v416 = vpop.xlane.xlu0 %415
    %v417 = vmul.f32 %v408, 0.015625
    %v418 = vmul.f32 %v410, 0.015625
    %v419 = vmul.f32 %v414, 0.015625
    %v420 = vmul.f32 %v416, 0.015625
    %v421 = vmul.f32 %v417, %v417
    %v422 = vmul.f32 %v418, %v418
    %v423 = vsub.f32 %v419, %v421
    %v424 = vsub.f32 %v420, %v422
    %v425 = vmax.f32 %v423, 0.0
    %v426 = vmax.f32 %v424, 0.0
    %v427 = vadd.f32 %v425, 1e-05
    %v428 = vadd.f32 %v426, 1e-05
    %v429 = vrsqrt.pop %v427
    %v430 = vrsqrt.pop %v428
    %v431 = vsub.f32 %v405, %v417
    %v432 = vsub.f32 %v406, %v418
    %v433 = vmul.f32 %v431, %v429
    %v434 = vmul.f32 %v432, %v430
    %v435 = vld [vmem:[%s7] sm:$0x1]
    %v437 = vlaneseq
    %v438 = vshrl.u32 %v437, 7
    %v439 = vsub.s32 0, %v438
    %v440 = vrot.slane %v435, %v439
    %v442 = vmul.f32 %v433, %v440
    %v443 = vmul.f32 %v434, %v440
    %v444 = vld [vmem:[%s8] sm:$0x1]
    %v446 = vlaneseq
    %v447 = vshrl.u32 %v446, 7
    %v448 = vsub.s32 0, %v447
    %v449 = vrot.slane %v444, %v448
    %v451 = vadd.f32 %v442, %v449
    %v452 = vadd.f32 %v443, %v449
    %v453 = vpack.c.bf16 %v452, %v451
    %v455 = vunpack.c.l.b16 %v453
    %v456 = vunpack.c.h.b16 %v453
    %v457 = vpack.c.b16 %v455, %v455
    %v458 = vpack.c.b16 %v456, %v456
    %461 = vst [vmem:[#allocation10] sm:$0xf] %v457
    %462 = vst [vmem:[#allocation10 + $0x4] sm:$0xf] %v458
    // Predicated region
    $region54: #{tpu_custom_call.1} parent=1 // pred_check
      _
    $region55: #{tpu_custom_call.1} parent=1 // pred_check_branch
      %464 = sbr.rel (0) target = $region57
    $region56: #{tpu_custom_call.1} parent=1 // pred_region
      %s466 = ssub.s32 128, 128
      %467 = vsyncadd [#allocation4], %s466
      %s468 = sshll.u32 [#allocation10], 4
      %s469 = int_to_ptr.vmem [resolvable:$true] %s468
      %474 = dma.vmem_to_hbm [thread:$0]  %s469, 128, %s9, [#allocation4], 64, 64, 4
    $region57: #{tpu_custom_call.1} parent=1 // pred_fallthru
      _
    // Predicated region
    $region58: #{tpu_custom_call.1} parent=1 // pred_check
      _
    $region59: #{tpu_custom_call.1} parent=1 // pred_check_branch
      %476 = sbr.rel (0) target = $region61
    $region60: #{tpu_custom_call.1} parent=1 // pred_region
      %477 = dma.done [#allocation4], 128
    $region61: #{tpu_custom_call.1} parent=1 // pred_fallthru
      _
    %478 = vsyncpa [#allocation3], 1
    %479 = vsyncpa [#allocation6], 1
    %480 = vsyncpa [#allocation9], 1
    %481 = vsyncpa [#allocation4], 1

// kernel: tpu_custom_call.1
$region0: #{tpu_custom_call.1}
  #allocation0 [shape = 'u32[]', space=smem, size = 0x4, offset = 0x4, fixed_abs, tag = 'smem constant byte address 0x4 - core index']
  #allocation1 [shape = 'u32[144,128]{1,0:T(1,128)}', space=vmem, size = 0x12000, scoped, tag = 'internal scratch']
  %s0 = inlined_call_operand.hbm [shape: f32[16,32], index: 0, kind: input, shape index: {}]
  %s1 = inlined_call_operand.hbm [shape: bf16[32,256], index: 1, kind: input, shape index: {}]
  %s2 = inlined_call_operand.vmem [shape: f32[1,256], index: 2, kind: input, shape index: {}]
  %s3 = inlined_call_operand.hbm [shape: bf16[128,128], index: 3, kind: input, shape index: {}]
  %s4 = inlined_call_operand.vmem [shape: f32[1,128], index: 4, kind: input, shape index: {}]
  %s5 = inlined_call_operand.hbm [shape: bf16[128,128], index: 5, kind: input, shape index: {}]
  %s6 = inlined_call_operand.vmem [shape: f32[1,128], index: 6, kind: input, shape index: {}]
  %s7 = inlined_call_operand.vmem [shape: f32[1,128], index: 7, kind: input, shape index: {}]
  %s8 = inlined_call_operand.vmem [shape: f32[1,128], index: 8, kind: input, shape index: {}]
  %s9 = inlined_call_operand.hbm [shape: bf16[16,128], index: 9, kind: output, shape index: {}]
  %s10 = sld [smem:[#allocation0]]
  $region62: #{tpu_custom_call.1} parent=0
    _
  %s12 = ssub.s32 1, %s10
  %s13 = scalar_select 0, %s12, %s10
  $region1: #{tpu_custom_call.1} parent=0
    #allocation2 [shape = 'u8[8192]{0}', space=vmem, size = 0x2000, scoped, tag = 'input window, operand 0, single buffered']
    #allocation3 [shape = 's32[1]{0}', space=sflag, size = 0x4, scoped, tag = 'scoped memory for tpu_custom_call.1']
    #allocation4 [shape = 's32[1]{0}', space=sflag, size = 0x4, scoped, tag = 'scoped memory for tpu_custom_call.1']
    #allocation5 [shape = 'u8[16384]{0}', space=vmem, size = 0x4000, scoped, tag = 'input window, operand 1, single buffered']
    #allocation6 [shape = 's32[1]{0}', space=sflag, size = 0x4, scoped, tag = 'scoped memory for tpu_custom_call.1']
    #allocation7 [shape = 'u8[32768]{0}', space=vmem, size = 0x8000, scoped, tag = 'input window, operand 3, single buffered']
    #allocation8 [shape = 'u8[32768]{0}', space=vmem, size = 0x8000, scoped, tag = 'input window, operand 5, single buffered']
    #allocation9 [shape = 's32[1]{0}', space=sflag, size = 0x4, scoped, tag = 'scoped memory for tpu_custom_call.1']
    #allocation10 [shape = 'u8[4096]{0}', space=vmem, size = 0x1000, scoped, tag = 'output window, operand 0, single buffered']
    %14 = vsyncpa [#allocation3], 0
    %15 = vsyncpa [#allocation6], 0
    %16 = vsyncpa [#allocation9], 0
    %17 = vsyncpa [#allocation4], 0
    // Predicated region
    $region2: #{tpu_custom_call.1} parent=1 // pred_check
      _
    $region3: #{tpu_custom_call.1} parent=1 // pred_check_branch
      %19 = sbr.rel (0) target = $region5
    $region4: #{tpu_custom_call.1} parent=1 // pred_region
      %s21 = ssub.s32 256, 256
      %22 = vsyncadd [#allocation3], %s21
      %s23 = sshll.u32 [#allocation2], 4
      %s24 = int_to_ptr.vmem [resolvable:$true] %s23
      %29 = dma.hbm_to_vmem [thread:$0]  %s0, 256, %s24, [#allocation3], 128, 128, 8
    $region5: #{tpu_custom_call.1} parent=1 // pred_fallthru
      _
    // Predicated region
    $region6: #{tpu_custom_call.1} parent=1 // pred_check
      _
    $region7: #{tpu_custom_call.1} parent=1 // pred_check_branch
      %31 = sbr.rel (0) target = $region9
    $region8: #{tpu_custom_call.1} parent=1 // pred_region
      %s33 = ssub.s32 512, 512
      %34 = vsyncadd [#allocation6], %s33
      %s35 = sshll.u32 [#allocation5], 4
      %s36 = int_to_ptr.vmem [resolvable:$true] %s35
      %41 = dma.hbm_to_vmem [thread:$0]  %s1, 512, %s36, [#allocation6], 128, 128, 8
    $region9: #{tpu_custom_call.1} parent=1 // pred_fallthru
      _
    // Predicated region
    $region10: #{tpu_custom_call.1} parent=1 // pred_check
      _
    $region11: #{tpu_custom_call.1} parent=1 // pred_check_branch
      %43 = sbr.rel (0) target = $region13
    $region12: #{tpu_custom_call.1} parent=1 // pred_region
      _
    $region13: #{tpu_custom_call.1} parent=1 // pred_fallthru
      _
    // Predicated region
    $region14: #{tpu_custom_call.1} parent=1 // pred_check
      _
    $region15: #{tpu_custom_call.1} parent=1 // pred_check_branch
      %45 = sbr.rel (0) target = $region17
    $region16: #{tpu_custom_call.1} parent=1 // pred_region
      %s47 = ssub.s32 1024, 1024
      %48 = vsyncadd [#allocation6], %s47
      %s49 = sshll.u32 [#allocation7], 4
      %s50 = int_to_ptr.vmem [resolvable:$true] %s49
      %55 = dma.hbm_to_vmem [thread:$0]  %s3, 1024, %s50, [#allocation6], 64, 64, 4
    $region17: #{tpu_custom_call.1} parent=1 // pred_fallthru
      _
    // Predicated region
    $region18: #{tpu_custom_call.1} parent=1 // pred_check
      _
    $region19: #{tpu_custom_call.1} parent=1 // pred_check_branch
      %57 = sbr.rel (0) target = $region21
    $region20: #{tpu_custom_call.1} parent=1 // pred_region
      _
    $region21: #{tpu_custom_call.1} parent=1 // pred_fallthru
      _
    // Predicated region
    $region22: #{tpu_custom_call.1} parent=1 // pred_check
      _
    $region23: #{tpu_custom_call.1} parent=1 // pred_check_branch
      %59 = sbr.rel (0) target = $region25
    $region24: #{tpu_custom_call.1} parent=1 // pred_region
      %s61 = ssub.s32 1024, 1024
      %62 = vsyncadd [#allocation9], %s61
      %s63 = sshll.u32 [#allocation8], 4
      %s64 = int_to_ptr.vmem [resolvable:$true] %s63
      %69 = dma.hbm_to_vmem [thread:$0]  %s5, 1024, %s64, [#allocation9], 64, 64, 4
    $region25: #{tpu_custom_call.1} parent=1 // pred_fallthru
      _
    // Predicated region
    $region26: #{tpu_custom_call.1} parent=1 // pred_check
      _
    $region27: #{tpu_custom_call.1} parent=1 // pred_check_branch
      %71 = sbr.rel (0) target = $region29
    $region28: #{tpu_custom_call.1} parent=1 // pred_region
      _
    $region29: #{tpu_custom_call.1} parent=1 // pred_fallthru
      _
    // Predicated region
    $region30: #{tpu_custom_call.1} parent=1 // pred_check
      _
    $region31: #{tpu_custom_call.1} parent=1 // pred_check_branch
      %73 = sbr.rel (0) target = $region33
    $region32: #{tpu_custom_call.1} parent=1 // pred_region
      _
    $region33: #{tpu_custom_call.1} parent=1 // pred_fallthru
      _
    // Predicated region
    $region34: #{tpu_custom_call.1} parent=1 // pred_check
      _
    $region35: #{tpu_custom_call.1} parent=1 // pred_check_branch
      %75 = sbr.rel (0) target = $region37
    $region36: #{tpu_custom_call.1} parent=1 // pred_region
      _
    $region37: #{tpu_custom_call.1} parent=1 // pred_fallthru
      _
    // Predicated region
    $region38: #{tpu_custom_call.1} parent=1 // pred_check
      _
    $region39: #{tpu_custom_call.1} parent=1 // pred_check_branch
      %77 = sbr.rel (0) target = $region41
    $region40: #{tpu_custom_call.1} parent=1 // pred_region
      %78 = dma.done [#allocation3], 256
    $region41: #{tpu_custom_call.1} parent=1 // pred_fallthru
      _
    // Predicated region
    $region42: #{tpu_custom_call.1} parent=1 // pred_check
      _
    $region43: #{tpu_custom_call.1} parent=1 // pred_check_branch
      %80 = sbr.rel (0) target = $region45
    $region44: #{tpu_custom_call.1} parent=1 // pred_region
      %81 = dma.done [#allocation6], 512
    $region45: #{tpu_custom_call.1} parent=1 // pred_fallthru
      _
    // Predicated region
    $region46: #{tpu_custom_call.1} parent=1 // pred_check
      _
    $region47: #{tpu_custom_call.1} parent=1 // pred_check_branch
      %83 = sbr.rel (0) target = $region49
    $region48: #{tpu_custom_call.1} parent=1 // pred_region
      %84 = dma.done [#allocation6], 1024
    $region49: #{tpu_custom_call.1} parent=1 // pred_fallthru
      _
    // Predicated region
    $region50: #{tpu_custom_call.1} parent=1 // pred_check
      _
    $region51: #{tpu_custom_call.1} parent=1 // pred_check_branch
      %86 = sbr.rel (0) target = $region53
    $region52: #{tpu_custom_call.1} parent=1 // pred_region
      %87 = dma.done [#allocation9], 1024
    $region53: #{tpu_custom_call.1} parent=1 // pred_fallthru
      _
    %v89 = vld [vmem:[#allocation2] sm:$0xff]
    %v90 = vld [vmem:[#allocation2 + $0x8] sm:$0xff]
    %v91 = vpack.c.bf16 %v90, %v89
    %v92 = vld [vmem:[#allocation5] sm:$0xff]
    %v93 = vld [vmem:[#allocation5 + $0x8] sm:$0xff]
    %v94 = vld [vmem:[#allocation5 + $0x10] sm:$0xff]
    %v95 = vld [vmem:[#allocation5 + $0x18] sm:$0xff]
    %v96 = vld [vmem:[%s2] sm:$0x3]
    %v98 = vlaneseq
    %v99 = vshrl.u32 %v98, 7
    %v100 = vsub.s32 0, %v99
    %v101 = vrot.slane %v96, %v100
    %v102 = vlaneseq
    %v103 = vshrl.u32 %v102, 7
    %v104 = vsub.s32 1, %v103
    %v105 = vrot.slane %v96, %v104
    %v112 = vunpack.c.l.b16 %v92
    %v113 = vunpack.c.h.b16 %v92
    %v114 = vunpack.c.l.b16 %v93
    %v115 = vunpack.c.h.b16 %v93
    %v116 = vunpack.c.l.b16 %v94
    %v117 = vunpack.c.h.b16 %v94
    %v118 = vunpack.c.l.b16 %v95
    %v119 = vunpack.c.h.b16 %v95
    %v120 = vpack.c.b16 %v114, %v112
    %v121 = vpack.c.b16 %v115, %v113
    %v122 = vpack.c.b16 %v118, %v116
    %v123 = vpack.c.b16 %v119, %v117
    %vm128 = vcmask 261120
    %v130 = vsel %vm128, %v91, 0
    %132 = vmatprep.subr.bf16.mxu0 %v121
    %133 = vmatpush1.bf16.msra.mxu0 %v120
    %134 = vmatprep.subr.bf16.mxu0 %v123
    %135 = vmatpush1.bf16.msra.mxu0 %v122
    %136 = vmatprep.subr.bf16.mxu0 0
    %137 = vmatpush1.bf16.msra.mxu0 0
    %138 = vmatprep.subr.bf16.mxu0 0
    %139 = vmatpush1.bf16.msra.mxu0 0
    %140 = vmatprep.subr.bf16.mxu0 0
    %141 = vmatpush1.bf16.msra.mxu0 0
    %142 = vmatprep.subr.bf16.mxu0 0
    %143 = vmatpush1.bf16.msra.mxu0 0
    %144 = vmatprep.subr.bf16.mxu0 0
    %145 = vmatpush1.bf16.msra.mxu0 0
    %146 = vmatprep.subr.bf16.mxu0 0
    %147 = vmatpush1.bf16.msra.mxu0 0
    %148 = vmatprep.subr.bf16.mxu0 0
    %149 = vmatpush1.bf16.msra.mxu0 0
    %150 = vmatprep.subr.bf16.mxu0 0
    %151 = vmatpush1.bf16.msra.mxu0 0
    %152 = vmatprep.subr.bf16.mxu0 0
    %153 = vmatpush1.bf16.msra.mxu0 0
    %154 = vmatprep.subr.bf16.mxu0 0
    %155 = vmatpush1.bf16.msra.mxu0 0
    %156 = vmatprep.subr.bf16.mxu0 0
    %157 = vmatpush1.bf16.msra.mxu0 0
    %158 = vmatprep.subr.bf16.mxu0 0
    %159 = vmatpush1.bf16.msra.mxu0 0
    %160 = vmatprep.subr.bf16.mxu0 0
    %161 = vmatpush1.bf16.msra.mxu0 0
    %162 = vmatprep.subr.bf16.mxu0 0
    %163 = vmatpush1.bf16.msra.mxu0 0
    %164 = vmatprep.mubr.bf16.mxu0 0
    %165 = vmatmul.mubr.bf16.gmra.mrb[0].mxu0 %v130
    %v166 = vpop.f32.mrb[0].mxu0
    %v167 = vadd.f32 %v101, %v166
    %v168 = vpop.f32.mrb[0].mxu0
    %v169 = vadd.f32 %v105, %v168
    %v170 = vpop.f32.mrb[0].mxu0
    %v171 = vadd.f32 %v101, %v170
    %v172 = vpop.f32.mrb[0].mxu0
    %v173 = vadd.f32 %v105, %v172
    %174 = vdwg.mxu0
    %v175 = vmax.f32 %v169, 0.0
    %v176 = vmax.f32 %v173, 0.0
    %v177 = vpack.c.bf16 %v176, %v175
    %v178 = vld [vmem:[#allocation7] sm:$0xf]
    %v179 = vld [vmem:[#allocation7 + $0x4] sm:$0xf]
    %v180 = vld [vmem:[#allocation7 + $0x8] sm:$0xf]
    %v181 = vld [vmem:[#allocation7 + $0xc] sm:$0xf]
    %v182 = vld [vmem:[#allocation7 + $0x10] sm:$0xf]
    %v183 = vld [vmem:[#allocation7 + $0x14] sm:$0xf]
    %v184 = vld [vmem:[#allocation7 + $0x18] sm:$0xf]
    %v185 = vld [vmem:[#allocation7 + $0x1c] sm:$0xf]
    %v186 = vld [vmem:[#allocation7 + $0x20] sm:$0xf]
    %v187 = vld [vmem:[#allocation7 + $0x24] sm:$0xf]
    %v188 = vld [vmem:[#allocation7 + $0x28] sm:$0xf]
    %v189 = vld [vmem:[#allocation7 + $0x2c] sm:$0xf]
    %v190 = vld [vmem:[#allocation7 + $0x30] sm:$0xf]
    %v191 = vld [vmem:[#allocation7 + $0x34] sm:$0xf]
    %v192 = vld [vmem:[#allocation7 + $0x38] sm:$0xf]
    %v193 = vld [vmem:[#allocation7 + $0x3c] sm:$0xf]
    %v194 = vld [vmem:[%s4] sm:$0x1]
    %v196 = vlaneseq
    %v197 = vshrl.u32 %v196, 7
    %v198 = vsub.s32 0, %v197
    %v199 = vrot.slane %v194, %v198
    %v217 = vunpack.c.l.b16 %v178
    %v218 = vunpack.c.l.b16 %v179
    %v219 = vunpack.c.l.b16 %v180
    %v220 = vunpack.c.l.b16 %v181
    %v221 = vunpack.c.l.b16 %v182
    %v222 = vunpack.c.l.b16 %v183
    %v223 = vunpack.c.l.b16 %v184
    %v224 = vunpack.c.l.b16 %v185
    %v225 = vunpack.c.l.b16 %v186
    %v226 = vunpack.c.l.b16 %v187
    %v227 = vunpack.c.l.b16 %v188
    %v228 = vunpack.c.l.b16 %v189
    %v229 = vunpack.c.l.b16 %v190
    %v230 = vunpack.c.l.b16 %v191
    %v231 = vunpack.c.l.b16 %v192
    %v232 = vunpack.c.l.b16 %v193
    %v233 = vpack.c.b16 %v218, %v217
    %v234 = vpack.c.b16 %v220, %v219
    %v235 = vpack.c.b16 %v222, %v221
    %v236 = vpack.c.b16 %v224, %v223
    %v237 = vpack.c.b16 %v226, %v225
    %v238 = vpack.c.b16 %v228, %v227
    %v239 = vpack.c.b16 %v230, %v229
    %v240 = vpack.c.b16 %v232, %v231
    %249 = vmatprep.subr.bf16.mxu0 0
    %250 = vmatpush1.bf16.msra.mxu0 %v233
    %251 = vmatprep.subr.bf16.mxu0 0
    %252 = vmatpush1.bf16.msra.mxu0 %v234
    %253 = vmatprep.subr.bf16.mxu0 0
    %254 = vmatpush1.bf16.msra.mxu0 %v235
    %255 = vmatprep.subr.bf16.mxu0 0
    %256 = vmatpush1.bf16.msra.mxu0 %v236
    %257 = vmatprep.subr.bf16.mxu0 0
    %258 = vmatpush1.bf16.msra.mxu0 %v237
    %259 = vmatprep.subr.bf16.mxu0 0
    %260 = vmatpush1.bf16.msra.mxu0 %v238
    %261 = vmatprep.subr.bf16.mxu0 0
    %262 = vmatpush1.bf16.msra.mxu0 %v239
    %263 = vmatprep.subr.bf16.mxu0 0
    %264 = vmatpush1.bf16.msra.mxu0 %v240
    %265 = vmatprep.subr.bf16.mxu0 0
    %266 = vmatpush1.bf16.msra.mxu0 0
    %267 = vmatprep.subr.bf16.mxu0 0
    %268 = vmatpush1.bf16.msra.mxu0 0
    %269 = vmatprep.subr.bf16.mxu0 0
    %270 = vmatpush1.bf16.msra.mxu0 0
    %271 = vmatprep.subr.bf16.mxu0 0
    %272 = vmatpush1.bf16.msra.mxu0 0
    %273 = vmatprep.subr.bf16.mxu0 0
    %274 = vmatpush1.bf16.msra.mxu0 0
    %275 = vmatprep.subr.bf16.mxu0 0
    %276 = vmatpush1.bf16.msra.mxu0 0
    %277 = vmatprep.subr.bf16.mxu0 0
    %278 = vmatpush1.bf16.msra.mxu0 0
    %279 = vmatprep.subr.bf16.mxu0 0
    %280 = vmatpush1.bf16.msra.mxu0 0
    %281 = vmatprep.mubr.bf16.mxu0 0
    %282 = vmatmul.mubr.bf16.gmra.mrb[0].mxu0 %v177
    %v283 = vpop.f32.mrb[0].mxu0
    %v284 = vadd.f32 %v199, %v283
    %v285 = vpop.f32.mrb[0].mxu0
    %v286 = vpop.f32.mrb[0].mxu0
    %v287 = vadd.f32 %v199, %v286
    %v288 = vpop.f32.mrb[0].mxu0
    %289 = vdwg.mxu0
    %v290 = vmax.f32 %v284, 0.0
    %v291 = vmax.f32 %v287, 0.0
    %v292 = vpack.c.bf16 %v291, %v290
    %v293 = vld [vmem:[#allocation8] sm:$0xf]
    %v294 = vld [vmem:[#allocation8 + $0x4] sm:$0xf]
    %v295 = vld [vmem:[#allocation8 + $0x8] sm:$0xf]
    %v296 = vld [vmem:[#allocation8 + $0xc] sm:$0xf]
    %v297 = vld [vmem:[#allocation8 + $0x10] sm:$0xf]
    %v298 = vld [vmem:[#allocation8 + $0x14] sm:$0xf]
    %v299 = vld [vmem:[#allocation8 + $0x18] sm:$0xf]
    %v300 = vld [vmem:[#allocation8 + $0x1c] sm:$0xf]
    %v301 = vld [vmem:[#allocation8 + $0x20] sm:$0xf]
    %v302 = vld [vmem:[#allocation8 + $0x24] sm:$0xf]
    %v303 = vld [vmem:[#allocation8 + $0x28] sm:$0xf]
    %v304 = vld [vmem:[#allocation8 + $0x2c] sm:$0xf]
    %v305 = vld [vmem:[#allocation8 + $0x30] sm:$0xf]
    %v306 = vld [vmem:[#allocation8 + $0x34] sm:$0xf]
    %v307 = vld [vmem:[#allocation8 + $0x38] sm:$0xf]
    %v308 = vld [vmem:[#allocation8 + $0x3c] sm:$0xf]
    %v309 = vld [vmem:[%s6] sm:$0x1]
    %v311 = vlaneseq
    %v312 = vshrl.u32 %v311, 7
    %v313 = vsub.s32 0, %v312
    %v314 = vrot.slane %v309, %v313
    %v332 = vunpack.c.l.b16 %v293
    %v333 = vunpack.c.l.b16 %v294
    %v334 = vunpack.c.l.b16 %v295
    %v335 = vunpack.c.l.b16 %v296
    %v336 = vunpack.c.l.b16 %v297
    %v337 = vunpack.c.l.b16 %v298
    %v338 = vunpack.c.l.b16 %v299
    %v339 = vunpack.c.l.b16 %v300
    %v340 = vunpack.c.l.b16 %v301
    %v341 = vunpack.c.l.b16 %v302
    %v342 = vunpack.c.l.b16 %v303
    %v343 = vunpack.c.l.b16 %v304
    %v344 = vunpack.c.l.b16 %v305
    %v345 = vunpack.c.l.b16 %v306
    %v346 = vunpack.c.l.b16 %v307
    %v347 = vunpack.c.l.b16 %v308
    %v348 = vpack.c.b16 %v333, %v332
    %v349 = vpack.c.b16 %v335, %v334
    %v350 = vpack.c.b16 %v337, %v336
    %v351 = vpack.c.b16 %v339, %v338
    %v352 = vpack.c.b16 %v341, %v340
    %v353 = vpack.c.b16 %v343, %v342
    %v354 = vpack.c.b16 %v345, %v344
    %v355 = vpack.c.b16 %v347, %v346
    %364 = vmatprep.subr.bf16.mxu0 0
    %365 = vmatpush1.bf16.msra.mxu0 %v348
    %366 = vmatprep.subr.bf16.mxu0 0
    %367 = vmatpush1.bf16.msra.mxu0 %v349
    %368 = vmatprep.subr.bf16.mxu0 0
    %369 = vmatpush1.bf16.msra.mxu0 %v350
    %370 = vmatprep.subr.bf16.mxu0 0
    %371 = vmatpush1.bf16.msra.mxu0 %v351
    %372 = vmatprep.subr.bf16.mxu0 0
    %373 = vmatpush1.bf16.msra.mxu0 %v352
    %374 = vmatprep.subr.bf16.mxu0 0
    %375 = vmatpush1.bf16.msra.mxu0 %v353
    %376 = vmatprep.subr.bf16.mxu0 0
    %377 = vmatpush1.bf16.msra.mxu0 %v354
    %378 = vmatprep.subr.bf16.mxu0 0
    %379 = vmatpush1.bf16.msra.mxu0 %v355
    %380 = vmatprep.subr.bf16.mxu0 0
    %381 = vmatpush1.bf16.msra.mxu0 0
    %382 = vmatprep.subr.bf16.mxu0 0
    %383 = vmatpush1.bf16.msra.mxu0 0
    %384 = vmatprep.subr.bf16.mxu0 0
    %385 = vmatpush1.bf16.msra.mxu0 0
    %386 = vmatprep.subr.bf16.mxu0 0
    %387 = vmatpush1.bf16.msra.mxu0 0
    %388 = vmatprep.subr.bf16.mxu0 0
    %389 = vmatpush1.bf16.msra.mxu0 0
    %390 = vmatprep.subr.bf16.mxu0 0
    %391 = vmatpush1.bf16.msra.mxu0 0
    %392 = vmatprep.subr.bf16.mxu0 0
    %393 = vmatpush1.bf16.msra.mxu0 0
    %394 = vmatprep.subr.bf16.mxu0 0
    %395 = vmatpush1.bf16.msra.mxu0 0
    %396 = vmatprep.mubr.bf16.mxu0 0
    %397 = vmatmul.mubr.bf16.gmra.mrb[0].mxu0 %v292
    %v398 = vpop.f32.mrb[0].mxu0
    %v399 = vadd.f32 %v314, %v398
    %v400 = vpop.f32.mrb[0].mxu0
    %v401 = vpop.f32.mrb[0].mxu0
    %v402 = vadd.f32 %v314, %v401
    %v403 = vpop.f32.mrb[0].mxu0
    %404 = vdwg.mxu0
    %v405 = vadd.f32 %v399, %v167
    %v406 = vadd.f32 %v402, %v171
    %407 = vadd.xlane.f32.xlu0 %v405
    %v408 = vpop.xlane.xlu0 %407
    %409 = vadd.xlane.f32.xlu0 %v406
    %v410 = vpop.xlane.xlu0 %409
    %v411 = vmul.f32 %v405, %v405
    %v412 = vmul.f32 %v406, %v406
    %413 = vadd.xlane.f32.xlu0 %v411
    %v414 = vpop.xlane.xlu0 %413
    %415 = vadd.xlane.f32.xlu0 %v412
    %v416 = vpop.xlane.xlu0 %415
    %v417 = vmul.f32 %v408, 0.015625
    %v418 = vmul.f32 %v410, 0.015625
    %v419 = vmul.f32 %v414, 0.015625
    %v420 = vmul.f32 %v416, 0.015625
    %v421 = vmul.f32 %v417, %v417
    %v422 = vmul.f32 %v418, %v418
    %v423 = vsub.f32 %v419, %v421
    %v424 = vsub.f32 %v420, %v422
    %v425 = vmax.f32 %v423, 0.0
    %v426 = vmax.f32 %v424, 0.0
    %v427 = vadd.f32 %v425, 1e-05
    %v428 = vadd.f32 %v426, 1e-05
    %v429 = vrsqrt.pop %v427
    %v430 = vrsqrt.pop %v428
    %v431 = vsub.f32 %v405, %v417
    %v432 = vsub.f32 %v406, %v418
    %v433 = vmul.f32 %v431, %v429
    %v434 = vmul.f32 %v432, %v430
    %v435 = vld [vmem:[%s7] sm:$0x1]
    %v437 = vlaneseq
    %v438 = vshrl.u32 %v437, 7
    %v439 = vsub.s32 0, %v438
    %v440 = vrot.slane %v435, %v439
    %v442 = vmul.f32 %v433, %v440
    %v443 = vmul.f32 %v434, %v440
    %v444 = vld [vmem:[%s8] sm:$0x1]
    %v446 = vlaneseq
    %v447 = vshrl.u32 %v446, 7
    %v448 = vsub.s32 0, %v447
    %v449 = vrot.slane %v444, %v448
    %v451 = vadd.f32 %v442, %v449
    %v452 = vadd.f32 %v443, %v449
    %v453 = vpack.c.bf16 %v452, %v451
    %v455 = vunpack.c.l.b16 %v453
    %v456 = vunpack.c.h.b16 %v453
    %v457 = vpack.c.b16 %v455, %v455
    %v458 = vpack.c.b16 %v456, %v456
    %461 = vst [vmem:[#allocation10] sm:$0xf] %v457
    %462 = vst [vmem:[#allocation10 + $0x4] sm:$0xf] %v458
    // Predicated region
    $region54: #{tpu_custom_call.1} parent=1 // pred_check
      _
    $region55: #{tpu_custom_call.1} parent=1 // pred_check_branch
      %464 = sbr.rel (0) target = $region57
    $region56: #{tpu_custom_call.1} parent=1 // pred_region
      %s466 = ssub.s32 128, 128
      %467 = vsyncadd [#allocation4], %s466
      %s468 = sshll.u32 [#allocation10], 4
      %s469 = int_to_ptr.vmem [resolvable:$true] %s468
      %474 = dma.vmem_to_hbm [thread:$0]  %s469, 128, %s9, [#allocation4], 64, 64, 4
    $region57: #{tpu_custom_call.1} parent=1 // pred_fallthru
      _
    // Predicated region
    $region58: #{tpu_custom_call.1} parent=1 // pred_check
      _
    $region59: #{tpu_custom_call.1} parent=1 // pred_check_branch
      %476 = sbr.rel (0) target = $region61
    $region60: #{tpu_custom_call.1} parent=1 // pred_region
      %477 = dma.done [#allocation4], 128
    $region61: #{tpu_custom_call.1} parent=1 // pred_fallthru
      _
    %478 = vsyncpa [#allocation3], 1
    %479 = vsyncpa [#allocation6], 1
    %480 = vsyncpa [#allocation9], 1
    %481 = vsyncpa [#allocation4], 1

</llo_original>
